<compile_context>
chip_gen: v6e
topology: v6e:2x2x1
jax: 0.10.0
libtpu: 0.0.40
codegen_flags: <defaults>
</compile_context>

<pallas_src>
import jax
import jax.numpy as jnp
from jax.experimental import pallas as pl
from jax.experimental.pallas import tpu as pltpu

TILE_B_DEFAULT = 2048  # rows per grid step; multiple of 16 (bf16 sublane pack)


def _round_up(x, m):
    return (x + m - 1) // m * m


def basicff_kernel(x_ref, w1_ref, b1_ref, w2_ref, b2_ref, w3_ref, b3_ref, o_ref):
    # Whole MLP hot path for one batch tile: 3 bf16 MXU matmuls (fp32 accumulate)
    # + fp32 bias adds / ReLUs on the VPU, all resident in VMEM.
    x = x_ref[...]  # (TILE_B, fan_in) bf16
    h1 = jnp.dot(x, w1_ref[...], preferred_element_type=jnp.float32) + b1_ref[...]
    h1 = jnp.maximum(h1, 0.0)
    h2 = jnp.dot(h1.astype(jnp.bfloat16), w2_ref[...],
                 preferred_element_type=jnp.float32) + b2_ref[...]
    h2 = jnp.maximum(h2, 0.0)
    out = jnp.dot(h2.astype(jnp.bfloat16), w3_ref[...],
                  preferred_element_type=jnp.float32) + b3_ref[...]
    o_ref[...] = out.astype(o_ref.dtype)


def basic_ff(x, params, tile_b=TILE_B_DEFAULT):
    """Forward pass of BasicFF. x: (B, fan_in) or (B, C, H, W) with C*H*W == fan_in."""
    if x.ndim == 4:
        x = x.reshape(x.shape[0], -1)  # glue: NCHW -> (B, C*H*W), matches torch .view
    w1, b1, w2, b2, w3, b3 = params
    B, fan_in = x.shape
    hid1 = w1.shape[1]
    hid2 = w2.shape[1]
    fan_out = w3.shape[1]

    # bf16 for the big HBM streams (x + weights); biases stay fp32.
    xb = x.astype(jnp.bfloat16)
    w1b = w1.astype(jnp.bfloat16)
    w2b = w2.astype(jnp.bfloat16)
    w3b = w3.astype(jnp.bfloat16)

    # Tile the batch; pad B up to a multiple of tile_b so the last tile is full.
    tile_b = min(tile_b, _round_up(B, 16))
    padded_b = _round_up(B, tile_b)
    if padded_b != B:
        xb = jnp.pad(xb, ((0, padded_b - B), (0, 0)))
    grid = (padded_b // tile_b,)

    weight_bytes = (w1b.size + w2b.size + w3b.size) * 2 + (b1.size + b2.size + b3.size) * 4
    cost = pl.CostEstimate(
        flops=2 * padded_b * (fan_in * hid1 + hid1 * hid2 + hid2 * fan_out),
        transcendentals=0,
        bytes_accessed=padded_b * fan_in * 2 + padded_b * fan_out * 4 + weight_bytes,
    )

    out_padded = pl.pallas_call(
        basicff_kernel,
        out_shape=jax.ShapeDtypeStruct((padded_b, fan_out), jnp.float32),
        grid=grid,
        in_specs=[
            pl.BlockSpec((tile_b, fan_in), lambda i: (i, 0)),     # x: streamed per tile
            pl.BlockSpec((fan_in, hid1), lambda i: (0, 0)),       # w1: VMEM-resident
            pl.BlockSpec((1, hid1), lambda i: (0, 0)),            # b1
            pl.BlockSpec((hid1, hid2), lambda i: (0, 0)),         # w2
            pl.BlockSpec((1, hid2), lambda i: (0, 0)),            # b2
            pl.BlockSpec((hid2, fan_out), lambda i: (0, 0)),      # w3
            pl.BlockSpec((1, fan_out), lambda i: (0, 0)),         # b3
        ],
        out_specs=pl.BlockSpec((tile_b, fan_out), lambda i: (i, 0)),
        compiler_params=pltpu.CompilerParams(
            dimension_semantics=("parallel",),  # shard batch across TCs on v7x
        ),
        cost_estimate=cost,
    )(xb, w1b, b1, w2b, b2, w3b, b3)

    return out_padded[:B]


def init_params(key, fan_in=200, fan_out=7):
    """Deterministic PyTorch-Linear-style init (uniform +/-1/sqrt(fan_in)).
    Weights stored as (in, out) = transpose of torch's (out, in)."""
    def linear(k, n_in, n_out):
        kw, kb = jax.random.split(k)
        bound = 1.0 / jnp.sqrt(jnp.float32(n_in))
        w = jax.random.uniform(kw, (n_in, n_out), jnp.float32, -bound, bound)
        b = jax.random.uniform(kb, (1, n_out), jnp.float32, -bound, bound)
        return w, b

    k1, k2, k3 = jax.random.split(key, 3)
    w1, b1 = linear(k1, fan_in, 100)
    w2, b2 = linear(k2, 100, 10)
    w3, b3 = linear(k3, 10, fan_out)
    return (w1, b1, w2, b2, w3, b3)


def _ref_forward(x, params):
    """Plain-JAX reference with the same bf16 rounding of x/weights/activations
    (fp32 accumulate), so it matches the kernel tightly."""
    if x.ndim == 4:
        x = x.reshape(x.shape[0], -1)
    w1, b1, w2, b2, w3, b3 = params
    cast = lambda a: a.astype(jnp.bfloat16).astype(jnp.float32)
    h1 = jnp.maximum(cast(x) @ cast(w1) + b1, 0.0)
    h2 = jnp.maximum(cast(h1) @ cast(w2) + b2, 0.0)
    return cast(h2) @ cast(w3) + b3


if __name__ == "__main__":
    key = jax.random.PRNGKey(0)
    kp, kx = jax.random.split(key)

    fan_in, fan_out = 200, 7
    params = init_params(kp, fan_in, fan_out)

    # 4-D input path: (B=2, C=2, H=10, W=10) -> flattens to (2, 200) == fan_in.
    x = jax.random.normal(kx, (2, 2, 10, 10), dtype=jnp.float32)

    out = basic_ff(x, params)
    out = jax.block_until_ready(out)

    ref = _ref_forward(x, params)
    assert out.shape == (2, fan_out)
    assert jnp.allclose(out, ref, atol=1e-3, rtol=1e-3), (out, ref)

    # Also exercise the padded-tail path (B not a multiple of the tile).
    x_big = jax.random.normal(kx, (37, fan_in), dtype=jnp.float32)
    out_big = jax.block_until_ready(basic_ff(x_big, params))
    ref_big = _ref_forward(x_big, params)
    assert out_big.shape == (37, fan_out)
    assert jnp.allclose(out_big, ref_big, atol=1e-3, rtol=1e-3)

    print("KERNEL_OK")
</pallas_src>

<mosaic_0001>
module attributes {stable_mosaic.version = 11 : i64} {
  func.func @basicff_kernel(%arg0: i32, %arg1: memref<16x200xbf16, #tpu.memory_space<vmem>>, %arg2: memref<200x100xbf16, #tpu.memory_space<vmem>>, %arg3: memref<1x100xf32, #tpu.memory_space<vmem>>, %arg4: memref<100x10xbf16, #tpu.memory_space<vmem>>, %arg5: memref<1x10xf32, #tpu.memory_space<vmem>>, %arg6: memref<10x7xbf16, #tpu.memory_space<vmem>>, %arg7: memref<1x7xf32, #tpu.memory_space<vmem>>, %arg8: memref<16x7xf32, #tpu.memory_space<vmem>>) attributes {dimension_semantics = [#tpu.dimension_semantics<parallel>], iteration_bounds = array<i64: 1>, scalar_prefetch = 0 : i64, scratch_operands = 0 : i64, tpu.core_type = #tpu.core_type<tc>, window_params = [{transform_indices = @transform_0, window_bounds = array<i64: 16, 200>}, {pipeline_mode = #tpu.pipeline_mode<synchronous>, transform_indices = @transform_1, window_bounds = array<i64: 200, 100>}, {pipeline_mode = #tpu.pipeline_mode<synchronous>, transform_indices = @transform_2, window_bounds = array<i64: 1, 100>}, {pipeline_mode = #tpu.pipeline_mode<synchronous>, transform_indices = @transform_3, window_bounds = array<i64: 100, 10>}, {pipeline_mode = #tpu.pipeline_mode<synchronous>, transform_indices = @transform_4, window_bounds = array<i64: 1, 10>}, {pipeline_mode = #tpu.pipeline_mode<synchronous>, transform_indices = @transform_5, window_bounds = array<i64: 10, 7>}, {pipeline_mode = #tpu.pipeline_mode<synchronous>, transform_indices = @transform_6, window_bounds = array<i64: 1, 7>}, {transform_indices = @transform_7, window_bounds = array<i64: 16, 7>}]} {
    %c0 = arith.constant 0 : index
    %c0_0 = arith.constant 0 : index
    %0 = vector.load %arg1[%c0, %c0_0] : memref<16x200xbf16, #tpu.memory_space<vmem>>, vector<16x200xbf16>
    %c0_1 = arith.constant 0 : index
    %c0_2 = arith.constant 0 : index
    %1 = vector.load %arg2[%c0_1, %c0_2] : memref<200x100xbf16, #tpu.memory_space<vmem>>, vector<200x100xbf16>
    %cst = arith.constant dense<0.000000e+00> : vector<16x100xf32>
    %2 = tpu.matmul %0, %1, %cst {dimension_numbers = #tpu.dot_dimension_numbers<[1], [0], [0], [1], [0, 0, 1, 1], [], []>} : vector<16x200xbf16>, vector<200x100xbf16>, vector<16x100xf32> -> vector<16x100xf32>
    %c0_3 = arith.constant 0 : index
    %c0_4 = arith.constant 0 : index
    %3 = vector.load %arg3[%c0_3, %c0_4] : memref<1x100xf32, #tpu.memory_space<vmem>>, vector<1x100xf32>
    %4 = vector.broadcast %3 : vector<1x100xf32> to vector<16x100xf32>
    %5 = arith.addf %2, %4 : vector<16x100xf32>
    %cst_5 = arith.constant 0.000000e+00 : f32
    %6 = vector.broadcast %cst_5 : f32 to vector<16x100xf32>
    %7 = arith.maximumf %5, %6 : vector<16x100xf32>
    %8 = arith.truncf %7 : vector<16x100xf32> to vector<16x100xbf16>
    %c0_6 = arith.constant 0 : index
    %c0_7 = arith.constant 0 : index
    %9 = vector.load %arg4[%c0_6, %c0_7] : memref<100x10xbf16, #tpu.memory_space<vmem>>, vector<100x10xbf16>
    %cst_8 = arith.constant dense<0.000000e+00> : vector<16x10xf32>
    %10 = tpu.matmul %8, %9, %cst_8 {dimension_numbers = #tpu.dot_dimension_numbers<[1], [0], [0], [1], [0, 0, 1, 1], [], []>} : vector<16x100xbf16>, vector<100x10xbf16>, vector<16x10xf32> -> vector<16x10xf32>
    %c0_9 = arith.constant 0 : index
    %c0_10 = arith.constant 0 : index
    %11 = vector.load %arg5[%c0_9, %c0_10] : memref<1x10xf32, #tpu.memory_space<vmem>>, vector<1x10xf32>
    %12 = vector.broadcast %11 : vector<1x10xf32> to vector<16x10xf32>
    %13 = arith.addf %10, %12 : vector<16x10xf32>
    %cst_11 = arith.constant 0.000000e+00 : f32
    %14 = vector.broadcast %cst_11 : f32 to vector<16x10xf32>
    %15 = arith.maximumf %13, %14 : vector<16x10xf32>
    %16 = arith.truncf %15 : vector<16x10xf32> to vector<16x10xbf16>
    %c0_12 = arith.constant 0 : index
    %c0_13 = arith.constant 0 : index
    %17 = vector.load %arg6[%c0_12, %c0_13] : memref<10x7xbf16, #tpu.memory_space<vmem>>, vector<10x7xbf16>
    %cst_14 = arith.constant dense<0.000000e+00> : vector<16x7xf32>
    %18 = tpu.matmul %16, %17, %cst_14 {dimension_numbers = #tpu.dot_dimension_numbers<[1], [0], [0], [1], [0, 0, 1, 1], [], []>} : vector<16x10xbf16>, vector<10x7xbf16>, vector<16x7xf32> -> vector<16x7xf32>
    %c0_15 = arith.constant 0 : index
    %c0_16 = arith.constant 0 : index
    %19 = vector.load %arg7[%c0_15, %c0_16] : memref<1x7xf32, #tpu.memory_space<vmem>>, vector<1x7xf32>
    %20 = vector.broadcast %19 : vector<1x7xf32> to vector<16x7xf32>
    %21 = arith.addf %18, %20 : vector<16x7xf32>
    %c0_17 = arith.constant 0 : index
    %c0_18 = arith.constant 0 : index
    %22 = vector.load %arg8[%c0_17, %c0_18] : memref<16x7xf32, #tpu.memory_space<vmem>>, vector<16x7xf32>
    tpu.vector_store %arg8[%c0_17, %c0_18], %21 {strides = array<i32>} : memref<16x7xf32, #tpu.memory_space<vmem>>, vector<16x7xf32>,
    return
  }
  func.func @transform_0(%arg0: i32) -> (i32, i32) {
    %c0_i32 = arith.constant 0 : i32
    %c0_i32_0 = arith.constant 0 : i32
    return %arg0, %c0_i32 : i32, i32
  }
  func.func @transform_1(%arg0: i32) -> (i32, i32) {
    %c0_i32 = arith.constant 0 : i32
    %c0_i32_0 = arith.constant 0 : i32
    %c0_i32_1 = arith.constant 0 : i32
    return %c0_i32, %c0_i32_0 : i32, i32
  }
  func.func @transform_2(%arg0: i32) -> (i32, i32) {
    %c0_i32 = arith.constant 0 : i32
    %c0_i32_0 = arith.constant 0 : i32
    %c0_i32_1 = arith.constant 0 : i32
    return %c0_i32, %c0_i32_0 : i32, i32
  }
  func.func @transform_3(%arg0: i32) -> (i32, i32) {
    %c0_i32 = arith.constant 0 : i32
    %c0_i32_0 = arith.constant 0 : i32
    %c0_i32_1 = arith.constant 0 : i32
    return %c0_i32, %c0_i32_0 : i32, i32
  }
  func.func @transform_4(%arg0: i32) -> (i32, i32) {
    %c0_i32 = arith.constant 0 : i32
    %c0_i32_0 = arith.constant 0 : i32
    %c0_i32_1 = arith.constant 0 : i32
    return %c0_i32, %c0_i32_0 : i32, i32
  }
  func.func @transform_5(%arg0: i32) -> (i32, i32) {
    %c0_i32 = arith.constant 0 : i32
    %c0_i32_0 = arith.constant 0 : i32
    %c0_i32_1 = arith.constant 0 : i32
    return %c0_i32, %c0_i32_0 : i32, i32
  }
  func.func @transform_6(%arg0: i32) -> (i32, i32) {
    %c0_i32 = arith.constant 0 : i32
    %c0_i32_0 = arith.constant 0 : i32
    %c0_i32_1 = arith.constant 0 : i32
    return %c0_i32, %c0_i32_0 : i32, i32
  }
  func.func @transform_7(%arg0: i32) -> (i32, i32) {
    %c0_i32 = arith.constant 0 : i32
    %c0_i32_0 = arith.constant 0 : i32
    return %arg0, %c0_i32 : i32, i32
  }
}

</mosaic_0001>

<llo_original>
// kernel: tpu_custom_call.1
$region0: #{tpu_custom_call.1}
  #allocation0 [shape = 'u32[]', space=smem, size = 0x4, offset = 0x4, fixed_abs, tag = 'smem constant byte address 0x4 - core index']
  #allocation1 [shape = 'u32[144,128]{1,0:T(1,128)}', space=vmem, size = 0x12000, scoped, tag = 'internal scratch']
  %s0 = inlined_call_operand.vmem [shape: bf16[16,200], index: 0, kind: input, shape index: {}]
  %s1 = inlined_call_operand.hbm [shape: bf16[200,100], index: 1, kind: input, shape index: {}]
  %s2 = inlined_call_operand.vmem [shape: f32[1,100], index: 2, kind: input, shape index: {}]
  %s3 = inlined_call_operand.vmem [shape: bf16[100,10], index: 3, kind: input, shape index: {}]
  %s4 = inlined_call_operand.vmem [shape: f32[1,10], index: 4, kind: input, shape index: {}]
  %s5 = inlined_call_operand.vmem [shape: bf16[10,7], index: 5, kind: input, shape index: {}]
  %s6 = inlined_call_operand.vmem [shape: f32[1,7], index: 6, kind: input, shape index: {}]
  %s7 = inlined_call_operand.vmem [shape: f32[16,7], index: 7, kind: output, shape index: {}]
  %s8 = sld [smem:[#allocation0]]
  $region42: #{tpu_custom_call.1} parent=0
    _
  %s10 = ssub.s32 1, %s8
  %s11 = scalar_select 0, %s10, %s8
  $region1: #{tpu_custom_call.1} parent=0
    #allocation2 [shape = 'u8[51200]{0}', space=vmem, size = 0xc800, scoped, tag = 'input window, operand 1, single buffered']
    #allocation3 [shape = 's32[1]{0}', space=sflag, size = 0x4, scoped, tag = 'scoped memory for tpu_custom_call.1']
    %12 = vsyncpa [#allocation3], 0
    // Predicated region
    $region2: #{tpu_custom_call.1} parent=1 // pred_check
      _
    $region3: #{tpu_custom_call.1} parent=1 // pred_check_branch
      %14 = sbr.rel (0) target = $region5
    $region4: #{tpu_custom_call.1} parent=1 // pred_region
      _
    $region5: #{tpu_custom_call.1} parent=1 // pred_fallthru
      _
    // Predicated region
    $region6: #{tpu_custom_call.1} parent=1 // pred_check
      _
    $region7: #{tpu_custom_call.1} parent=1 // pred_check_branch
      %16 = sbr.rel (0) target = $region9
    $region8: #{tpu_custom_call.1} parent=1 // pred_region
      %s18 = ssub.s32 1600, 1600
      %19 = vsyncadd [#allocation3], %s18
      %s20 = sshll.u32 [#allocation2], 4
      %s21 = int_to_ptr.vmem [resolvable:$true] %s20
      %26 = dma.hbm_to_vmem [thread:$0]  %s1, 1600, %s21, [#allocation3], 64, 64, 4
    $region9: #{tpu_custom_call.1} parent=1 // pred_fallthru
      _
    // Predicated region
    $region10: #{tpu_custom_call.1} parent=1 // pred_check
      _
    $region11: #{tpu_custom_call.1} parent=1 // pred_check_branch
      %28 = sbr.rel (0) target = $region13
    $region12: #{tpu_custom_call.1} parent=1 // pred_region
      _
    $region13: #{tpu_custom_call.1} parent=1 // pred_fallthru
      _
    // Predicated region
    $region14: #{tpu_custom_call.1} parent=1 // pred_check
      _
    $region15: #{tpu_custom_call.1} parent=1 // pred_check_branch
      %30 = sbr.rel (0) target = $region17
    $region16: #{tpu_custom_call.1} parent=1 // pred_region
      _
    $region17: #{tpu_custom_call.1} parent=1 // pred_fallthru
      _
    // Predicated region
    $region18: #{tpu_custom_call.1} parent=1 // pred_check
      _
    $region19: #{tpu_custom_call.1} parent=1 // pred_check_branch
      %32 = sbr.rel (0) target = $region21
    $region20: #{tpu_custom_call.1} parent=1 // pred_region
      _
    $region21: #{tpu_custom_call.1} parent=1 // pred_fallthru
      _
    // Predicated region
    $region22: #{tpu_custom_call.1} parent=1 // pred_check
      _
    $region23: #{tpu_custom_call.1} parent=1 // pred_check_branch
      %34 = sbr.rel (0) target = $region25
    $region24: #{tpu_custom_call.1} parent=1 // pred_region
      _
    $region25: #{tpu_custom_call.1} parent=1 // pred_fallthru
      _
    // Predicated region
    $region26: #{tpu_custom_call.1} parent=1 // pred_check
      _
    $region27: #{tpu_custom_call.1} parent=1 // pred_check_branch
      %36 = sbr.rel (0) target = $region29
    $region28: #{tpu_custom_call.1} parent=1 // pred_region
      _
    $region29: #{tpu_custom_call.1} parent=1 // pred_fallthru
      _
    // Predicated region
    $region30: #{tpu_custom_call.1} parent=1 // pred_check
      _
    $region31: #{tpu_custom_call.1} parent=1 // pred_check_branch
      %38 = sbr.rel (0) target = $region33
    $region32: #{tpu_custom_call.1} parent=1 // pred_region
      %39 = dma.done [#allocation3], 1600
    $region33: #{tpu_custom_call.1} parent=1 // pred_fallthru
      _
    %v41 = vld [vmem:[%s0] sm:$0xff]
    %v42 = vld [vmem:[%s0 + $0x8] sm:$0xff]
    %v43 = vld [vmem:[#allocation2] sm:$0xf]
    %v44 = vld [vmem:[#allocation2 + $0x4] sm:$0xf]
    %v45 = vld [vmem:[#allocation2 + $0x8] sm:$0xf]
    %v46 = vld [vmem:[#allocation2 + $0xc] sm:$0xf]
    %v47 = vld [vmem:[#allocation2 + $0x10] sm:$0xf]
    %v48 = vld [vmem:[#allocation2 + $0x14] sm:$0xf]
    %v49 = vld [vmem:[#allocation2 + $0x18] sm:$0xf]
    %v50 = vld [vmem:[#allocation2 + $0x1c] sm:$0xf]
    %v51 = vld [vmem:[#allocation2 + $0x20] sm:$0xf]
    %v52 = vld [vmem:[#allocation2 + $0x24] sm:$0xf]
    %v53 = vld [vmem:[#allocation2 + $0x28] sm:$0xf]
    %v54 = vld [vmem:[#allocation2 + $0x2c] sm:$0xf]
    %v55 = vld [vmem:[#allocation2 + $0x30] sm:$0xf]
    %v56 = vld [vmem:[#allocation2 + $0x34] sm:$0xf]
    %v57 = vld [vmem:[#allocation2 + $0x38] sm:$0xf]
    %v58 = vld [vmem:[#allocation2 + $0x3c] sm:$0xf]
    %v59 = vld [vmem:[#allocation2 + $0x40] sm:$0xf]
    %v60 = vld [vmem:[#allocation2 + $0x44] sm:$0xf]
    %v61 = vld [vmem:[#allocation2 + $0x48] sm:$0xf]
    %v62 = vld [vmem:[#allocation2 + $0x4c] sm:$0xf]
    %v63 = vld [vmem:[#allocation2 + $0x50] sm:$0xf]
    %v64 = vld [vmem:[#allocation2 + $0x54] sm:$0xf]
    %v65 = vld [vmem:[#allocation2 + $0x58] sm:$0xf]
    %v66 = vld [vmem:[#allocation2 + $0x5c] sm:$0xf]
    %v67 = vld [vmem:[#allocation2 + $0x60] sm:$0xf]
    %v68 = vld [vmem:[%s2] sm:$0x1]
    %v70 = vlaneseq
    %v71 = vshrl.u32 %v70, 7
    %v72 = vsub.s32 0, %v71
    %v73 = vrot.slane %v68, %v72
    %v77 = vunpack.c.l.b16 %v41
    %v78 = vunpack.c.h.b16 %v41
    %v79 = vunpack.c.l.b16 %v42
    %v80 = vunpack.c.h.b16 %v42
    %v81 = vpack.c.b16 %v79, %v77
    %v82 = vpack.c.b16 %v80, %v78
    %v109 = vunpack.c.l.b16 %v43
    %v110 = vunpack.c.l.b16 %v44
    %v111 = vunpack.c.l.b16 %v45
    %v112 = vunpack.c.l.b16 %v46
    %v113 = vunpack.c.l.b16 %v47
    %v114 = vunpack.c.l.b16 %v48
    %v115 = vunpack.c.l.b16 %v49
    %v116 = vunpack.c.l.b16 %v50
    %v117 = vunpack.c.l.b16 %v51
    %v118 = vunpack.c.l.b16 %v52
    %v119 = vunpack.c.l.b16 %v53
    %v120 = vunpack.c.l.b16 %v54
    %v121 = vunpack.c.l.b16 %v55
    %v122 = vunpack.c.l.b16 %v56
    %v123 = vunpack.c.l.b16 %v57
    %v124 = vunpack.c.l.b16 %v58
    %v125 = vunpack.c.l.b16 %v59
    %v126 = vunpack.c.l.b16 %v60
    %v127 = vunpack.c.l.b16 %v61
    %v128 = vunpack.c.l.b16 %v62
    %v129 = vunpack.c.l.b16 %v63
    %v130 = vunpack.c.l.b16 %v64
    %v131 = vunpack.c.l.b16 %v65
    %v132 = vunpack.c.l.b16 %v66
    %v133 = vunpack.c.l.b16 %v67
    %v134 = vpack.c.b16 %v110, %v109
    %v135 = vpack.c.b16 %v112, %v111
    %v136 = vpack.c.b16 %v114, %v113
    %v137 = vpack.c.b16 %v116, %v115
    %v138 = vpack.c.b16 %v118, %v117
    %v139 = vpack.c.b16 %v120, %v119
    %v140 = vpack.c.b16 %v122, %v121
    %v141 = vpack.c.b16 %v124, %v123
    %v142 = vpack.c.b16 %v126, %v125
    %v143 = vpack.c.b16 %v128, %v127
    %v144 = vpack.c.b16 %v130, %v129
    %v145 = vpack.c.b16 %v132, %v131
    %v146 = vpack.c.b16 %v133, %v133
    %vm159 = vcmask 588800
    %v161 = vsel %vm159, %v82, 0
    %vm163 = vcmask 1043456
    %v165 = vsel %vm163, %v146, 0
    %167 = vmatprep.subr.bf16.mxu0 0
    %168 = vmatpush1.bf16.msra.mxu0 %v141
    %169 = vmatprep.subr.bf16.mxu0 0
    %170 = vmatpush1.bf16.msra.mxu0 %v140
    %171 = vmatprep.subr.bf16.mxu0 0
    %172 = vmatpush1.bf16.msra.mxu0 %v139
    %173 = vmatprep.subr.bf16.mxu0 0
    %174 = vmatpush1.bf16.msra.mxu0 %v138
    %175 = vmatprep.subr.bf16.mxu0 0
    %176 = vmatpush1.bf16.msra.mxu0 %v137
    %177 = vmatprep.subr.bf16.mxu0 0
    %178 = vmatpush1.bf16.msra.mxu0 %v136
    %179 = vmatprep.subr.bf16.mxu0 0
    %180 = vmatpush1.bf16.msra.mxu0 %v135
    %181 = vmatprep.subr.bf16.mxu0 0
    %182 = vmatpush1.bf16.msra.mxu0 %v134
    %183 = vmatprep.subr.bf16.mxu0 0
    %184 = vmatpush2.bf16.msra.mxu0 0
    %185 = vmatprep.subr.bf16.mxu0 0
    %186 = vmatpush2.bf16.msra.mxu0 0
    %187 = vmatprep.subr.bf16.mxu0 0
    %188 = vmatpush2.bf16.msra.mxu0 0
    %189 = vmatprep.subr.bf16.mxu0 0
    %190 = vmatpush2.bf16.msra.mxu0 %v165
    %191 = vmatprep.subr.bf16.mxu0 0
    %192 = vmatpush2.bf16.msra.mxu0 %v145
    %193 = vmatprep.subr.bf16.mxu0 0
    %194 = vmatpush2.bf16.msra.mxu0 %v144
    %195 = vmatprep.subr.bf16.mxu0 0
    %196 = vmatpush2.bf16.msra.mxu0 %v143
    %197 = vmatprep.subr.bf16.mxu0 0
    %198 = vmatpush2.bf16.msra.mxu0 %v142
    %199 = vmatprep.mubr.bf16.mxu0 %v161
    %200 = vmatmul.mubr.bf16.gmra.mxu0 %v81
    %v201 = vpop.f32.mrf.mxu0
    %v202 = vadd.f32 %v73, %v201
    %v203 = vpop.f32.mrf.mxu0
    %v204 = vpop.f32.mrf.mxu0
    %v205 = vadd.f32 %v73, %v204
    %v206 = vpop.f32.mrf.mxu0
    %207 = vdwg.mxu0
    %v208 = vmax.f32 %v202, 0.0
    %v209 = vmax.f32 %v205, 0.0
    %v210 = vpack.c.bf16 %v209, %v208
    %v211 = vld [vmem:[%s3] sm:$0xf]
    %v212 = vld [vmem:[%s3 + $0x4] sm:$0xf]
    %v213 = vld [vmem:[%s3 + $0x8] sm:$0xf]
    %v214 = vld [vmem:[%s3 + $0xc] sm:$0xf]
    %v215 = vld [vmem:[%s3 + $0x10] sm:$0xf]
    %v216 = vld [vmem:[%s3 + $0x14] sm:$0xf]
    %v217 = vld [vmem:[%s3 + $0x18] sm:$0xf]
    %v218 = vld [vmem:[%s3 + $0x1c] sm:$0xf]
    %v219 = vld [vmem:[%s3 + $0x20] sm:$0xf]
    %v220 = vld [vmem:[%s3 + $0x24] sm:$0xf]
    %v221 = vld [vmem:[%s3 + $0x28] sm:$0xf]
    %v222 = vld [vmem:[%s3 + $0x2c] sm:$0xf]
    %v223 = vld [vmem:[%s3 + $0x30] sm:$0x3]
    %v224 = vld [vmem:[%s4] sm:$0x1]
    %v226 = vlaneseq
    %v227 = vshrl.u32 %v226, 7
    %v228 = vsub.s32 0, %v227
    %v229 = vrot.slane %v224, %v228
    %v244 = vunpack.c.l.b16 %v211
    %v245 = vunpack.c.l.b16 %v212
    %v246 = vunpack.c.l.b16 %v213
    %v247 = vunpack.c.l.b16 %v214
    %v248 = vunpack.c.l.b16 %v215
    %v249 = vunpack.c.l.b16 %v216
    %v250 = vunpack.c.l.b16 %v217
    %v251 = vunpack.c.l.b16 %v218
    %v252 = vunpack.c.l.b16 %v219
    %v253 = vunpack.c.l.b16 %v220
    %v254 = vunpack.c.l.b16 %v221
    %v255 = vunpack.c.l.b16 %v222
    %v256 = vunpack.c.l.b16 %v223
    %v257 = vpack.c.b16 %v245, %v244
    %v258 = vpack.c.b16 %v247, %v246
    %v259 = vpack.c.b16 %v249, %v248
    %v260 = vpack.c.b16 %v251, %v250
    %v261 = vpack.c.b16 %v253, %v252
    %v262 = vpack.c.b16 %v255, %v254
    %v263 = vpack.c.b16 %v256, %v256
    %vm270 = vcmask 818176
    %v272 = vsel %vm270, %v210, 0
    %vm274 = vcmask 1041408
    %v276 = vsel %vm274, %v263, 0
    %278 = vmatprep.subr.bf16.mxu0 0
    %279 = vmatpush1.bf16.msra.mxu0 0
    %280 = vmatprep.subr.bf16.mxu0 0
    %281 = vmatpush1.bf16.msra.mxu0 %v276
    %282 = vmatprep.subr.bf16.mxu0 0
    %283 = vmatpush1.bf16.msra.mxu0 %v262
    %284 = vmatprep.subr.bf16.mxu0 0
    %285 = vmatpush1.bf16.msra.mxu0 %v261
    %286 = vmatprep.subr.bf16.mxu0 0
    %287 = vmatpush1.bf16.msra.mxu0 %v260
    %288 = vmatprep.subr.bf16.mxu0 0
    %289 = vmatpush1.bf16.msra.mxu0 %v259
    %290 = vmatprep.subr.bf16.mxu0 0
    %291 = vmatpush1.bf16.msra.mxu0 %v258
    %292 = vmatprep.subr.bf16.mxu0 0
    %293 = vmatpush1.bf16.msra.mxu0 %v257
    %294 = vmatprep.subr.bf16.mxu0 0
    %295 = vmatpush2.bf16.msra.mxu0 0
    %296 = vmatprep.subr.bf16.mxu0 0
    %297 = vmatpush2.bf16.msra.mxu0 0
    %298 = vmatprep.subr.bf16.mxu0 0
    %299 = vmatpush2.bf16.msra.mxu0 0
    %300 = vmatprep.subr.bf16.mxu0 0
    %301 = vmatpush2.bf16.msra.mxu0 0
    %302 = vmatprep.subr.bf16.mxu0 0
    %303 = vmatpush2.bf16.msra.mxu0 0
    %304 = vmatprep.subr.bf16.mxu0 0
    %305 = vmatpush2.bf16.msra.mxu0 0
    %306 = vmatprep.subr.bf16.mxu0 0
    %307 = vmatpush2.bf16.msra.mxu0 0
    %308 = vmatprep.subr.bf16.mxu0 0
    %309 = vmatpush2.bf16.msra.mxu0 0
    %310 = vmatprep.mubr.bf16.mxu0 0
    %311 = vmatmul.mubr.bf16.gmra.mxu0 %v272
    %v312 = vpop.f32.mrf.mxu0
    %v313 = vadd.f32 %v229, %v312
    %v314 = vpop.f32.mrf.mxu0
    %v315 = vpop.f32.mrf.mxu0
    %v316 = vadd.f32 %v229, %v315
    %v317 = vpop.f32.mrf.mxu0
    %318 = vdwg.mxu0
    %v319 = vmax.f32 %v313, 0.0
    %v320 = vmax.f32 %v316, 0.0
    %v321 = vpack.c.bf16 %v320, %v319
    %v322 = vld [vmem:[%s5] sm:$0xf]
    %v323 = vld [vmem:[%s5 + $0x4] sm:$0x1]
    %v324 = vld [vmem:[%s6] sm:$0x1]
    %v326 = vlaneseq
    %v327 = vshrl.u32 %v326, 7
    %v328 = vsub.s32 0, %v327
    %v329 = vrot.slane %v324, %v328
    %v333 = vunpack.c.l.b16 %v322
    %v334 = vunpack.c.l.b16 %v323
    %v335 = vpack.c.b16 %v334, %v333
    %vm336 = vcmask 80896
    %v338 = vsel %vm336, %v321, 0
    %vm340 = vcmask 1044480
    %v342 = vsel %vm340, %v335, 0
    %344 = vmatprep.subr.bf16.mxu0 0
    %345 = vmatpush1.bf16.msra.mxu0 0
    %346 = vmatprep.subr.bf16.mxu0 0
    %347 = vmatpush1.bf16.msra.mxu0 0
    %348 = vmatprep.subr.bf16.mxu0 0
    %349 = vmatpush1.bf16.msra.mxu0 0
    %350 = vmatprep.subr.bf16.mxu0 0
    %351 = vmatpush1.bf16.msra.mxu0 0
    %352 = vmatprep.subr.bf16.mxu0 0
    %353 = vmatpush1.bf16.msra.mxu0 0
    %354 = vmatprep.subr.bf16.mxu0 0
    %355 = vmatpush1.bf16.msra.mxu0 0
    %356 = vmatprep.subr.bf16.mxu0 0
    %357 = vmatpush1.bf16.msra.mxu0 0
    %358 = vmatprep.subr.bf16.mxu0 0
    %359 = vmatpush1.bf16.msra.mxu0 %v342
    %360 = vmatprep.subr.bf16.mxu0 0
    %361 = vmatpush2.bf16.msra.mxu0 0
    %362 = vmatprep.subr.bf16.mxu0 0
    %363 = vmatpush2.bf16.msra.mxu0 0
    %364 = vmatprep.subr.bf16.mxu0 0
    %365 = vmatpush2.bf16.msra.mxu0 0
    %366 = vmatprep.subr.bf16.mxu0 0
    %367 = vmatpush2.bf16.msra.mxu0 0
    %368 = vmatprep.subr.bf16.mxu0 0
    %369 = vmatpush2.bf16.msra.mxu0 0
    %370 = vmatprep.subr.bf16.mxu0 0
    %371 = vmatpush2.bf16.msra.mxu0 0
    %372 = vmatprep.subr.bf16.mxu0 0
    %373 = vmatpush2.bf16.msra.mxu0 0
    %374 = vmatprep.subr.bf16.mxu0 0
    %375 = vmatpush2.bf16.msra.mxu0 0
    %376 = vmatprep.mubr.bf16.mxu0 0
    %377 = vmatmul.mubr.bf16.gmra.mxu0 %v338
    %v378 = vpop.f32.mrf.mxu0
    %v379 = vadd.f32 %v329, %v378
    %v380 = vpop.f32.mrf.mxu0
    %v381 = vpop.f32.mrf.mxu0
    %v382 = vadd.f32 %v329, %v381
    %v383 = vpop.f32.mrf.mxu0
    %384 = vdwg.mxu0
    %vm385 = vcmask 56320
    %386 = vst.msk [vmem:[%s7] sm:$0xff] %vm385, %v379
    %387 = vst.msk [vmem:[%s7 + $0x8] sm:$0xff] %vm385, %v382
    // Predicated region
    $region34: #{tpu_custom_call.1} parent=1 // pred_check
      _
    $region35: #{tpu_custom_call.1} parent=1 // pred_check_branch
      %389 = sbr.rel (0) target = $region37
    $region36: #{tpu_custom_call.1} parent=1 // pred_region
      _
    $region37: #{tpu_custom_call.1} parent=1 // pred_fallthru
      _
    // Predicated region
    $region38: #{tpu_custom_call.1} parent=1 // pred_check
      _
    $region39: #{tpu_custom_call.1} parent=1 // pred_check_branch
      %391 = sbr.rel (0) target = $region41
    $region40: #{tpu_custom_call.1} parent=1 // pred_region
      _
    $region41: #{tpu_custom_call.1} parent=1 // pred_fallthru
      _
    %392 = vsyncpa [#allocation3], 1

</llo_original>
